<compile_context>
chip_gen: v7x
topology: tpu7x:2x2x1
jax: 0.10.0
libtpu: 0.0.40
codegen_flags: <defaults>
</compile_context>

<pallas_src>
import jax
import jax.numpy as jnp
from jax.experimental import pallas as pl
from jax.experimental.pallas import tpu as pltpu

_LANES = 128
_SUBLANES = 8
_MAX_TILE_ROWS = 512  # 512*128*4B = 256 KiB per f32 tile


def _round_up(x: int, m: int) -> int:
    return (x + m - 1) // m * m


def _make_kernel(n_bin: int, n_aux: int, tile_rows: int, steps: int):
    def kernel(ob_ref, tb_ref, wb_ref, oa_ref, ta_ref, bin_out, aux_out):
        i = pl.program_id(1)

        @pl.when(i == 0)
        def _():
            bin_out[...] = jnp.zeros_like(bin_out)
            aux_out[...] = jnp.zeros_like(aux_out)

        # Global flat element index of every element in this tile (for tail masking).
        base_row = (pl.program_id(0) * steps + i) * tile_rows
        row_ids = jax.lax.broadcasted_iota(jnp.int32, (tile_rows, _LANES), 0)
        col_ids = jax.lax.broadcasted_iota(jnp.int32, (tile_rows, _LANES), 1)
        flat_idx = (base_row + row_ids) * _LANES + col_ids

        # ----- weighted BCE-with-logits (bin head) -----
        # numerically stable: max(x,0) - x*t + log1p(exp(-|x|))
        x = ob_ref[...].astype(jnp.float32)
        t = tb_ref[...].astype(jnp.float32)
        w = wb_ref[...].astype(jnp.float32)
        bin_e = w * (jnp.maximum(x, 0.0) - x * t + jnp.log1p(jnp.exp(-jnp.abs(x))))
        bin_e = jnp.where(flat_idx < n_bin, bin_e, 0.0)

        # ----- unweighted BCE-with-logits (aux head) -----
        xa = oa_ref[...].astype(jnp.float32)
        ta = ta_ref[...].astype(jnp.float32)
        aux_e = jnp.maximum(xa, 0.0) - xa * ta + jnp.log1p(jnp.exp(-jnp.abs(xa)))
        aux_e = jnp.where(flat_idx < n_aux, aux_e, 0.0)

        # VPU-only sublane fold into the resident (8,128) accumulator blocks.
        bin_out[...] += bin_e.reshape(tile_rows // _SUBLANES, _SUBLANES, _LANES).sum(axis=0)
        aux_out[...] += aux_e.reshape(tile_rows // _SUBLANES, _SUBLANES, _LANES).sum(axis=0)

    return kernel


def _to_slab(x, rows: int):
    """Flatten to a lane/sublane-dense (rows, 128) slab, zero-padding the tail."""
    flat = x.reshape(-1)
    total = rows * _LANES
    if total > flat.size:
        flat = jnp.pad(flat, (0, total - flat.size))
    return flat.reshape(rows, _LANES)


def custom_loss(output_bin, target_bin, weight_bin, output_aux, target_aux,
                loss_weight: float = 1.0):
    # NOTE: loss_weight is stored by the PyTorch module but unused in forward(); parity only.
    del loss_weight

    n_bin = int(output_bin.size)
    n_aux = int(output_aux.size)
    n_max = max(n_bin, n_aux)

    rows_needed = pl.cdiv(n_max, _LANES)
    tile_rows = min(_MAX_TILE_ROWS, _round_up(rows_needed, _SUBLANES))
    num_tiles = pl.cdiv(rows_needed, tile_rows)
    num_splits = 2 if num_tiles >= 2 else 1      # use both TCs on v7x when there is work
    steps = pl.cdiv(num_tiles, num_splits)
    rows = num_splits * steps * tile_rows

    slabs = [_to_slab(a, rows) for a in
             (output_bin, target_bin, weight_bin, output_aux, target_aux)]

    kernel = _make_kernel(n_bin, n_aux, tile_rows, steps)

    in_spec = pl.BlockSpec((tile_rows, _LANES), lambda s, i: (s * steps + i, 0))
    out_spec = pl.BlockSpec((_SUBLANES, _LANES), lambda s, i: (s, 0))

    in_bytes = sum(int(a.size) * a.dtype.itemsize for a in slabs)
    out_bytes = 2 * num_splits * _SUBLANES * _LANES * 4
    cost = pl.CostEstimate(
        flops=8 * (n_bin + n_aux),
        transcendentals=2 * (n_bin + n_aux),
        bytes_accessed=in_bytes + out_bytes,
    )

    bin_part, aux_part = pl.pallas_call(
        kernel,
        out_shape=(
            jax.ShapeDtypeStruct((num_splits * _SUBLANES, _LANES), jnp.float32),
            jax.ShapeDtypeStruct((num_splits * _SUBLANES, _LANES), jnp.float32),
        ),
        grid_spec=pltpu.PrefetchScalarGridSpec(
            num_scalar_prefetch=0,
            grid=(num_splits, steps),
            in_specs=[in_spec] * 5,
            out_specs=(out_spec, out_spec),
        ),
        compiler_params=pltpu.CompilerParams(
            dimension_semantics=("parallel", "arbitrary")),
        cost_estimate=cost,
    )(*slabs)

    # Tiny cross-lane finalize outside the kernel (keeps the kernel XLU-free).
    bin_loss = jnp.sum(bin_part) / jnp.float32(n_bin)   # 'mean' reduction
    aux_loss = jnp.sum(aux_part) / jnp.float32(n_aux)   # 'mean' reduction
    return 0.5 * bin_loss + 0.5 * aux_loss


def _reference(output_bin, target_bin, weight_bin, output_aux, target_aux):
    def bce(x, t, w=None):
        e = jnp.maximum(x, 0.0) - x * t + jnp.log1p(jnp.exp(-jnp.abs(x)))
        if w is not None:
            e = w * e
        return jnp.mean(e)
    return 0.5 * bce(output_bin, target_bin, weight_bin) + 0.5 * bce(output_aux, target_aux)


if __name__ == "__main__":
    key = jax.random.PRNGKey(0)

    def make_inputs(k, shape):
        k1, k2, k3, k4, k5 = jax.random.split(k, 5)
        output_bin = jax.random.normal(k1, shape, dtype=jnp.float32)
        target_bin = (jax.random.uniform(k2, shape) > 0.5).astype(jnp.float32)
        weight_bin = jax.random.uniform(k3, shape, dtype=jnp.float32)
        output_aux = jax.random.normal(k4, shape, dtype=jnp.float32)
        target_aux = (jax.random.uniform(k5, shape) > 0.5).astype(jnp.float32)
        return output_bin, target_bin, weight_bin, output_aux, target_aux

    shapes = [
        (2, 4, 16, 16),   # base NCHW case (single tile)
        (3, 5, 17, 13),   # size not a multiple of 128 -> exercises tail masking
        (8, 8, 64, 64),   # multiple tiles -> exercises grid pipeline + 2-way split
    ]
    keys = jax.random.split(key, len(shapes))
    for k, shape in zip(keys, shapes):
        args = make_inputs(k, shape)
        loss = jax.block_until_ready(custom_loss(*args, loss_weight=1.0))
        ref = _reference(*args)
        assert jnp.allclose(loss, ref, atol=1e-5, rtol=1e-5), (shape, loss, ref)

    print("KERNEL_OK")
</pallas_src>

<mosaic_0001>
module attributes {stable_mosaic.version = 11 : i64} {
  func.func @kernel(%arg0: i32, %arg1: i32, %arg2: memref<16x128xf32, #tpu.memory_space<vmem>>, %arg3: memref<16x128xf32, #tpu.memory_space<vmem>>, %arg4: memref<16x128xf32, #tpu.memory_space<vmem>>, %arg5: memref<16x128xf32, #tpu.memory_space<vmem>>, %arg6: memref<16x128xf32, #tpu.memory_space<vmem>>, %arg7: memref<8x128xf32, #tpu.memory_space<vmem>>, %arg8: memref<8x128xf32, #tpu.memory_space<vmem>>) attributes {dimension_semantics = [#tpu.dimension_semantics<parallel>, #tpu.dimension_semantics<arbitrary>], iteration_bounds = array<i64: 1, 1>, scalar_prefetch = 0 : i64, scratch_operands = 0 : i64, tpu.core_type = #tpu.core_type<tc>, window_params = [{transform_indices = @transform_0, window_bounds = array<i64: 16, 128>}, {transform_indices = @transform_1, window_bounds = array<i64: 16, 128>}, {transform_indices = @transform_2, window_bounds = array<i64: 16, 128>}, {transform_indices = @transform_3, window_bounds = array<i64: 16, 128>}, {transform_indices = @transform_4, window_bounds = array<i64: 16, 128>}, {transform_indices = @transform_5, window_bounds = array<i64: 8, 128>}, {transform_indices = @transform_6, window_bounds = array<i64: 8, 128>}]} {
    %c0_i32 = arith.constant 0 : i32
    %0 = arith.cmpi eq, %arg1, %c0_i32 : i32
    %1 = arith.extui %0 : i1 to i32
    %c0_i32_0 = arith.constant 0 : i32
    %2 = arith.cmpi ne, %1, %c0_i32_0 : i32
    scf.if %2 {
      %cst_26 = arith.constant 0.000000e+00 : f32
      %57 = vector.broadcast %cst_26 : f32 to vector<8x128xf32>
      %c0_27 = arith.constant 0 : index
      %c0_28 = arith.constant 0 : index
      %58 = vector.load %arg7[%c0_27, %c0_28] : memref<8x128xf32, #tpu.memory_space<vmem>>, vector<8x128xf32>
      tpu.vector_store %arg7[%c0_27, %c0_28], %57 {strides = array<i32>} : memref<8x128xf32, #tpu.memory_space<vmem>>, vector<8x128xf32>,
      %cst_29 = arith.constant 0.000000e+00 : f32
      %59 = vector.broadcast %cst_29 : f32 to vector<8x128xf32>
      %c0_30 = arith.constant 0 : index
      %c0_31 = arith.constant 0 : index
      %60 = vector.load %arg8[%c0_30, %c0_31] : memref<8x128xf32, #tpu.memory_space<vmem>>, vector<8x128xf32>
      tpu.vector_store %arg8[%c0_30, %c0_31], %59 {strides = array<i32>} : memref<8x128xf32, #tpu.memory_space<vmem>>, vector<8x128xf32>,
    } else {
    }
    %c1_i32 = arith.constant 1 : i32
    %3 = arith.muli %arg0, %c1_i32 : i32
    %4 = arith.addi %3, %arg1 : i32
    %c16_i32 = arith.constant 16 : i32
    %5 = arith.muli %4, %c16_i32 : i32
    %6 = tpu.iota {dimensions = array<i32: 0>} : vector<16x128xi32>
    %7 = tpu.iota {dimensions = array<i32: 1>} : vector<16x128xi32>
    %8 = vector.broadcast %5 : i32 to vector<16x128xi32>
    %9 = arith.addi %8, %6 : vector<16x128xi32>
    %c128_i32 = arith.constant 128 : i32
    %10 = vector.broadcast %c128_i32 : i32 to vector<16x128xi32>
    %11 = arith.muli %9, %10 : vector<16x128xi32>
    %12 = arith.addi %11, %7 : vector<16x128xi32>
    %c0 = arith.constant 0 : index
    %c0_1 = arith.constant 0 : index
    %13 = vector.load %arg2[%c0, %c0_1] : memref<16x128xf32, #tpu.memory_space<vmem>>, vector<16x128xf32>
    %c0_2 = arith.constant 0 : index
    %c0_3 = arith.constant 0 : index
    %14 = vector.load %arg3[%c0_2, %c0_3] : memref<16x128xf32, #tpu.memory_space<vmem>>, vector<16x128xf32>
    %c0_4 = arith.constant 0 : index
    %c0_5 = arith.constant 0 : index
    %15 = vector.load %arg4[%c0_4, %c0_5] : memref<16x128xf32, #tpu.memory_space<vmem>>, vector<16x128xf32>
    %cst = arith.constant 0.000000e+00 : f32
    %16 = vector.broadcast %cst : f32 to vector<16x128xf32>
    %17 = arith.maximumf %13, %16 : vector<16x128xf32>
    %18 = arith.mulf %13, %14 : vector<16x128xf32>
    %19 = arith.subf %17, %18 : vector<16x128xf32>
    %20 = math.absf %13 : vector<16x128xf32>
    %cst_6 = arith.constant 0.000000e+00 : f32
    %21 = vector.broadcast %cst_6 : f32 to vector<16x128xf32>
    %22 = arith.subf %21, %20 : vector<16x128xf32>
    %23 = math.exp %22 : vector<16x128xf32>
    %24 = math.log1p %23 : vector<16x128xf32>
    %25 = arith.addf %19, %24 : vector<16x128xf32>
    %26 = arith.mulf %15, %25 : vector<16x128xf32>
    %c2048_i32 = arith.constant 2048 : i32
    %27 = vector.broadcast %c2048_i32 : i32 to vector<16x128xi32>
    %28 = arith.cmpi slt, %12, %27 : vector<16x128xi32>
    %cst_7 = arith.constant 0.000000e+00 : f32
    %29 = vector.broadcast %cst_7 : f32 to vector<16x128xf32>
    %30 = arith.select %28, %26, %29 : vector<16x128xi1>, vector<16x128xf32>
    %c0_8 = arith.constant 0 : index
    %c0_9 = arith.constant 0 : index
    %31 = vector.load %arg5[%c0_8, %c0_9] : memref<16x128xf32, #tpu.memory_space<vmem>>, vector<16x128xf32>
    %c0_10 = arith.constant 0 : index
    %c0_11 = arith.constant 0 : index
    %32 = vector.load %arg6[%c0_10, %c0_11] : memref<16x128xf32, #tpu.memory_space<vmem>>, vector<16x128xf32>
    %cst_12 = arith.constant 0.000000e+00 : f32
    %33 = vector.broadcast %cst_12 : f32 to vector<16x128xf32>
    %34 = arith.maximumf %31, %33 : vector<16x128xf32>
    %35 = arith.mulf %31, %32 : vector<16x128xf32>
    %36 = arith.subf %34, %35 : vector<16x128xf32>
    %37 = math.absf %31 : vector<16x128xf32>
    %cst_13 = arith.constant 0.000000e+00 : f32
    %38 = vector.broadcast %cst_13 : f32 to vector<16x128xf32>
    %39 = arith.subf %38, %37 : vector<16x128xf32>
    %40 = math.exp %39 : vector<16x128xf32>
    %41 = math.log1p %40 : vector<16x128xf32>
    %42 = arith.addf %36, %41 : vector<16x128xf32>
    %c2048_i32_14 = arith.constant 2048 : i32
    %43 = vector.broadcast %c2048_i32_14 : i32 to vector<16x128xi32>
    %44 = arith.cmpi slt, %12, %43 : vector<16x128xi32>
    %cst_15 = arith.constant 0.000000e+00 : f32
    %45 = vector.broadcast %cst_15 : f32 to vector<16x128xf32>
    %46 = arith.select %44, %42, %45 : vector<16x128xi1>, vector<16x128xf32>
    %c0_16 = arith.constant 0 : index
    %c0_17 = arith.constant 0 : index
    %47 = vector.load %arg7[%c0_16, %c0_17] : memref<8x128xf32, #tpu.memory_space<vmem>>, vector<8x128xf32>
    %48 = vector.shape_cast %30 : vector<16x128xf32> to vector<2x8x128xf32>
    %cst_18 = arith.constant dense<0.000000e+00> : vector<8x128xf32>
    %49 = vector.multi_reduction <add>, %48, %cst_18 [0] : vector<2x8x128xf32> to vector<8x128xf32>
    %50 = arith.addf %47, %49 : vector<8x128xf32>
    %c0_19 = arith.constant 0 : index
    %c0_20 = arith.constant 0 : index
    %51 = vector.load %arg7[%c0_19, %c0_20] : memref<8x128xf32, #tpu.memory_space<vmem>>, vector<8x128xf32>
    tpu.vector_store %arg7[%c0_19, %c0_20], %50 {strides = array<i32>} : memref<8x128xf32, #tpu.memory_space<vmem>>, vector<8x128xf32>,
    %c0_21 = arith.constant 0 : index
    %c0_22 = arith.constant 0 : index
    %52 = vector.load %arg8[%c0_21, %c0_22] : memref<8x128xf32, #tpu.memory_space<vmem>>, vector<8x128xf32>
    %53 = vector.shape_cast %46 : vector<16x128xf32> to vector<2x8x128xf32>
    %cst_23 = arith.constant dense<0.000000e+00> : vector<8x128xf32>
    %54 = vector.multi_reduction <add>, %53, %cst_23 [0] : vector<2x8x128xf32> to vector<8x128xf32>
    %55 = arith.addf %52, %54 : vector<8x128xf32>
    %c0_24 = arith.constant 0 : index
    %c0_25 = arith.constant 0 : index
    %56 = vector.load %arg8[%c0_24, %c0_25] : memref<8x128xf32, #tpu.memory_space<vmem>>, vector<8x128xf32>
    tpu.vector_store %arg8[%c0_24, %c0_25], %55 {strides = array<i32>} : memref<8x128xf32, #tpu.memory_space<vmem>>, vector<8x128xf32>,
    return
  }
  func.func @transform_0(%arg0: i32, %arg1: i32) -> (i32, i32) {
    %c1_i32 = arith.constant 1 : i32
    %0 = arith.muli %arg0, %c1_i32 : i32
    %1 = arith.addi %0, %arg1 : i32
    %c0_i32 = arith.constant 0 : i32
    %c0_i32_0 = arith.constant 0 : i32
    return %1, %c0_i32 : i32, i32
  }
  func.func @transform_1(%arg0: i32, %arg1: i32) -> (i32, i32) {
    %c1_i32 = arith.constant 1 : i32
    %0 = arith.muli %arg0, %c1_i32 : i32
    %1 = arith.addi %0, %arg1 : i32
    %c0_i32 = arith.constant 0 : i32
    %c0_i32_0 = arith.constant 0 : i32
    return %1, %c0_i32 : i32, i32
  }
  func.func @transform_2(%arg0: i32, %arg1: i32) -> (i32, i32) {
    %c1_i32 = arith.constant 1 : i32
    %0 = arith.muli %arg0, %c1_i32 : i32
    %1 = arith.addi %0, %arg1 : i32
    %c0_i32 = arith.constant 0 : i32
    %c0_i32_0 = arith.constant 0 : i32
    return %1, %c0_i32 : i32, i32
  }
  func.func @transform_3(%arg0: i32, %arg1: i32) -> (i32, i32) {
    %c1_i32 = arith.constant 1 : i32
    %0 = arith.muli %arg0, %c1_i32 : i32
    %1 = arith.addi %0, %arg1 : i32
    %c0_i32 = arith.constant 0 : i32
    %c0_i32_0 = arith.constant 0 : i32
    return %1, %c0_i32 : i32, i32
  }
  func.func @transform_4(%arg0: i32, %arg1: i32) -> (i32, i32) {
    %c1_i32 = arith.constant 1 : i32
    %0 = arith.muli %arg0, %c1_i32 : i32
    %1 = arith.addi %0, %arg1 : i32
    %c0_i32 = arith.constant 0 : i32
    %c0_i32_0 = arith.constant 0 : i32
    return %1, %c0_i32 : i32, i32
  }
  func.func @transform_5(%arg0: i32, %arg1: i32) -> (i32, i32) {
    %c0_i32 = arith.constant 0 : i32
    %c0_i32_0 = arith.constant 0 : i32
    return %arg0, %c0_i32 : i32, i32
  }
  func.func @transform_6(%arg0: i32, %arg1: i32) -> (i32, i32) {
    %c0_i32 = arith.constant 0 : i32
    %c0_i32_0 = arith.constant 0 : i32
    return %arg0, %c0_i32 : i32, i32
  }
}

</mosaic_0001>

<llo_original>
// kernel: tpu_custom_call.1
$region0: #{tpu_custom_call.1}
  #allocation0 [shape = 'u32[]', space=smem, size = 0x4, offset = 0x4, fixed_abs, tag = 'smem constant byte address 0x4 - core index']
  #allocation1 [shape = 'u32[144,128]{1,0:T(1,128)}', space=vmem, size = 0x12000, scoped, tag = 'internal scratch']
  %s0 = inlined_call_operand.hbm [shape: f32[16,128], index: 0, kind: input, shape index: {}]
  %s1 = inlined_call_operand.hbm [shape: f32[16,128], index: 1, kind: input, shape index: {}]
  %s2 = inlined_call_operand.hbm [shape: f32[16,128], index: 2, kind: input, shape index: {}]
  %s3 = inlined_call_operand.hbm [shape: f32[16,128], index: 3, kind: input, shape index: {}]
  %s4 = inlined_call_operand.hbm [shape: f32[16,128], index: 4, kind: input, shape index: {}]
  %s5 = inlined_call_operand.hbm [shape: f32[8,128], index: 5, kind: output, shape index: {0}]
  %s6 = inlined_call_operand.hbm [shape: f32[8,128], index: 6, kind: output, shape index: {1}]
  %7 = xla_tuple %s5, %s6
  %s8 = sld [smem:[#allocation0]]
  $region62: #{tpu_custom_call.1} parent=0
    _
  %s10 = ssub.s32 1, %s8
  %s11 = scalar_select 0, %s10, %s8
  $region1: #{tpu_custom_call.1} parent=0
    #allocation2 [shape = 'u8[8192]{0}', space=vmem, size = 0x2000, scoped, tag = 'input window, operand 0, single buffered']
    #allocation3 [shape = 's32[1]{0}', space=sflag, size = 0x4, scoped, tag = 'scoped memory for tpu_custom_call.1']
    #allocation4 [shape = 's32[1]{0}', space=sflag, size = 0x4, scoped, tag = 'scoped memory for tpu_custom_call.1']
    #allocation5 [shape = 'u8[8192]{0}', space=vmem, size = 0x2000, scoped, tag = 'input window, operand 1, single buffered']
    #allocation6 [shape = 's32[1]{0}', space=sflag, size = 0x4, scoped, tag = 'scoped memory for tpu_custom_call.1']
    #allocation7 [shape = 'u8[8192]{0}', space=vmem, size = 0x2000, scoped, tag = 'input window, operand 2, single buffered']
    #allocation8 [shape = 'u8[8192]{0}', space=vmem, size = 0x2000, scoped, tag = 'input window, operand 3, single buffered']
    #allocation9 [shape = 's32[1]{0}', space=sflag, size = 0x4, scoped, tag = 'scoped memory for tpu_custom_call.1']
    #allocation10 [shape = 'u8[8192]{0}', space=vmem, size = 0x2000, scoped, tag = 'input window, operand 4, single buffered']
    #allocation11 [shape = 'u8[4096]{0}', space=vmem, size = 0x1000, scoped, tag = 'output window, operand 0, single buffered']
    #allocation12 [shape = 'u8[4096]{0}', space=vmem, size = 0x1000, scoped, tag = 'output window, operand 1, single buffered']
    #allocation13 [shape = 's32[1]{0}', space=sflag, size = 0x4, scoped, tag = 'scoped memory for tpu_custom_call.1']
    %12 = vsyncpa [#allocation3], 0
    %13 = vsyncpa [#allocation6], 0
    %14 = vsyncpa [#allocation9], 0
    %15 = vsyncpa [#allocation4], 0
    %16 = vsyncpa [#allocation13], 0
    // Predicated region
    $region2: #{tpu_custom_call.1} parent=1 // pred_check
      _
    $region3: #{tpu_custom_call.1} parent=1 // pred_check_branch
      %18 = sbr.rel (0) target = $region5
    $region4: #{tpu_custom_call.1} parent=1 // pred_region
      %s19 = sadd.s32 0, 0
      %s20 = smul.u32 2, %s19
      %s22 = ssub.s32 256, 256
      %23 = vsyncadd [#allocation3], %s22
      %s24 = smul.addr %s20, 128
      %s25 = scalar_lea.hbm %s0, %s24
      %s26 = sshll.u32 [#allocation2], 4
      %s27 = int_to_ptr.vmem [resolvable:$true] %s26
      %32 = dma.hbm_to_vmem [thread:$0]  %s25, 256, %s27, [#allocation3], 128, 128, 8
    $region5: #{tpu_custom_call.1} parent=1 // pred_fallthru
      _
    // Predicated region
    $region6: #{tpu_custom_call.1} parent=1 // pred_check
      _
    $region7: #{tpu_custom_call.1} parent=1 // pred_check_branch
      %34 = sbr.rel (0) target = $region9
    $region8: #{tpu_custom_call.1} parent=1 // pred_region
      %s35 = sadd.s32 0, 0
      %s36 = smul.u32 2, %s35
      %s38 = ssub.s32 256, 256
      %39 = vsyncadd [#allocation6], %s38
      %s40 = smul.addr %s36, 128
      %s41 = scalar_lea.hbm %s1, %s40
      %s42 = sshll.u32 [#allocation5], 4
      %s43 = int_to_ptr.vmem [resolvable:$true] %s42
      %48 = dma.hbm_to_vmem [thread:$0]  %s41, 256, %s43, [#allocation6], 128, 128, 8
    $region9: #{tpu_custom_call.1} parent=1 // pred_fallthru
      _
    // Predicated region
    $region10: #{tpu_custom_call.1} parent=1 // pred_check
      _
    $region11: #{tpu_custom_call.1} parent=1 // pred_check_branch
      %50 = sbr.rel (0) target = $region13
    $region12: #{tpu_custom_call.1} parent=1 // pred_region
      %s51 = sadd.s32 0, 0
      %s52 = smul.u32 2, %s51
      %s54 = ssub.s32 256, 256
      %55 = vsyncadd [#allocation6], %s54
      %s56 = smul.addr %s52, 128
      %s57 = scalar_lea.hbm %s2, %s56
      %s58 = sshll.u32 [#allocation7], 4
      %s59 = int_to_ptr.vmem [resolvable:$true] %s58
      %64 = dma.hbm_to_vmem [thread:$0]  %s57, 256, %s59, [#allocation6], 128, 128, 8
    $region13: #{tpu_custom_call.1} parent=1 // pred_fallthru
      _
    // Predicated region
    $region14: #{tpu_custom_call.1} parent=1 // pred_check
      _
    $region15: #{tpu_custom_call.1} parent=1 // pred_check_branch
      %66 = sbr.rel (0) target = $region17
    $region16: #{tpu_custom_call.1} parent=1 // pred_region
      %s67 = sadd.s32 0, 0
      %s68 = smul.u32 2, %s67
      %s70 = ssub.s32 256, 256
      %71 = vsyncadd [#allocation9], %s70
      %s72 = smul.addr %s68, 128
      %s73 = scalar_lea.hbm %s3, %s72
      %s74 = sshll.u32 [#allocation8], 4
      %s75 = int_to_ptr.vmem [resolvable:$true] %s74
      %80 = dma.hbm_to_vmem [thread:$0]  %s73, 256, %s75, [#allocation9], 128, 128, 8
    $region17: #{tpu_custom_call.1} parent=1 // pred_fallthru
      _
    // Predicated region
    $region18: #{tpu_custom_call.1} parent=1 // pred_check
      _
    $region19: #{tpu_custom_call.1} parent=1 // pred_check_branch
      %82 = sbr.rel (0) target = $region21
    $region20: #{tpu_custom_call.1} parent=1 // pred_region
      %s83 = sadd.s32 0, 0
      %s84 = smul.u32 2, %s83
      %s86 = ssub.s32 256, 256
      %87 = vsyncadd [#allocation9], %s86
      %s88 = smul.addr %s84, 128
      %s89 = scalar_lea.hbm %s4, %s88
      %s90 = sshll.u32 [#allocation10], 4
      %s91 = int_to_ptr.vmem [resolvable:$true] %s90
      %96 = dma.hbm_to_vmem [thread:$0]  %s89, 256, %s91, [#allocation9], 128, 128, 8
    $region21: #{tpu_custom_call.1} parent=1 // pred_fallthru
      _
    // Predicated region
    $region22: #{tpu_custom_call.1} parent=1 // pred_check
      _
    $region23: #{tpu_custom_call.1} parent=1 // pred_check_branch
      %98 = sbr.rel (0) target = $region25
    $region24: #{tpu_custom_call.1} parent=1 // pred_region
      %99 = dma.done [#allocation3], 256
    $region25: #{tpu_custom_call.1} parent=1 // pred_fallthru
      _
    // Predicated region
    $region26: #{tpu_custom_call.1} parent=1 // pred_check
      _
    $region27: #{tpu_custom_call.1} parent=1 // pred_check_branch
      %101 = sbr.rel (0) target = $region29
    $region28: #{tpu_custom_call.1} parent=1 // pred_region
      %102 = dma.done [#allocation6], 256
    $region29: #{tpu_custom_call.1} parent=1 // pred_fallthru
      _
    // Predicated region
    $region30: #{tpu_custom_call.1} parent=1 // pred_check
      _
    $region31: #{tpu_custom_call.1} parent=1 // pred_check_branch
      %104 = sbr.rel (0) target = $region33
    $region32: #{tpu_custom_call.1} parent=1 // pred_region
      %105 = dma.done [#allocation6], 256
    $region33: #{tpu_custom_call.1} parent=1 // pred_fallthru
      _
    // Predicated region
    $region34: #{tpu_custom_call.1} parent=1 // pred_check
      _
    $region35: #{tpu_custom_call.1} parent=1 // pred_check_branch
      %107 = sbr.rel (0) target = $region37
    $region36: #{tpu_custom_call.1} parent=1 // pred_region
      %108 = dma.done [#allocation9], 256
    $region37: #{tpu_custom_call.1} parent=1 // pred_fallthru
      _
    // Predicated region
    $region38: #{tpu_custom_call.1} parent=1 // pred_check
      _
    $region39: #{tpu_custom_call.1} parent=1 // pred_check_branch
      %110 = sbr.rel (0) target = $region41
    $region40: #{tpu_custom_call.1} parent=1 // pred_region
      %111 = dma.done [#allocation9], 256
    $region41: #{tpu_custom_call.1} parent=1 // pred_fallthru
      _
    %s112 = sadd.s32 0, 0
    %s113 = smul.u32 2, %s112
    %s114 = sadd.s32 0, 0
    %s115 = smul.u32 2, %s114
    %s116 = sadd.s32 0, 0
    %s117 = smul.u32 2, %s116
    %s118 = sadd.s32 0, 0
    %s119 = smul.u32 2, %s118
    %s120 = sadd.s32 0, 0
    %s121 = smul.u32 2, %s120
    %p122 = scmp.eq.s32.totalorder 0, 0
    // Predicated region
    $region42: #{tpu_custom_call.1} parent=1 // pred_check
      %p123 = pneg %p122
    $region43: #{tpu_custom_call.1} parent=1 // pred_check_branch
      %125 = sbr.rel (%p123) target = $region45
    $region44: #{tpu_custom_call.1} parent=1 // pred_region
      %126 = vst [vmem:[#allocation11] sm:$0xff] 0.0
      %127 = vst [vmem:[#allocation12] sm:$0xff] 0.0
    $region45: #{tpu_custom_call.1} parent=1 // pred_fallthru
      _
    %s128 = sadd.s32 0, 0
    %s129 = smul.u32 %s128, 16
    %v130 = vlaneseq
    %v131 = vshrl.u32 %v130, 7
    %v132 = vadd.s32 %v131, 8
    %v133 = vlaneseq
    %v134 = vand.u32 %v133, 127
    %v135 = vstv %s129
    %v136 = vadd.s32 %v135, %v131
    %v137 = vadd.s32 %v135, %v132
    %v138 = vmul.u32 %v136, 128
    %v139 = vmul.u32 %v137, 128
    %v140 = vadd.s32 %v138, %v134
    %v141 = vadd.s32 %v139, %v134
    %v142 = vld [vmem:[#allocation2] sm:$0xff]
    %v143 = vld [vmem:[#allocation2 + $0x8] sm:$0xff]
    %v144 = vld [vmem:[#allocation5] sm:$0xff]
    %v145 = vld [vmem:[#allocation5 + $0x8] sm:$0xff]
    %v146 = vld [vmem:[#allocation7] sm:$0xff]
    %v147 = vld [vmem:[#allocation7 + $0x8] sm:$0xff]
    %v148 = vmax.f32 %v142, 0.0
    %v149 = vmax.f32 %v143, 0.0
    %v150 = vmul.f32 %v142, %v144
    %v151 = vmul.f32 %v143, %v145
    %v152 = vsub.f32 %v148, %v150
    %v153 = vsub.f32 %v149, %v151
    %v154 = vand.u32 2147483647, %v142
    %v155 = vand.u32 2147483647, %v143
    %v156 = vsub.f32 0.0, %v154
    %v157 = vsub.f32 0.0, %v155
    %v158 = vmul.f32 %v156, 1.442695
    %v159 = vpow.pop %v158
    %v160 = vmul.f32 %v157, 1.442695
    %v161 = vpow.pop %v160
    %v162 = vadd.f32 %v159, 1.0
    %v163 = vlog2.pop %v162
    %v164 = vmul.f32 %v163, 0.6931472
    %v165 = vmul.f32 -0.5, %v159
    %v166 = vadd.f32 %v165, 1.0
    %v167 = vmul.f32 %v166, %v159
    %v168 = vand.u32 2147483647, %v159
    %vm169 = vcmp.lt.f32.partialorder %v168, 0.0004427343
    %v170 = vsel %vm169, %v167, %v164
    %v171 = vadd.f32 %v161, 1.0
    %v172 = vlog2.pop %v171
    %v173 = vmul.f32 %v172, 0.6931472
    %v174 = vmul.f32 -0.5, %v161
    %v175 = vadd.f32 %v174, 1.0
    %v176 = vmul.f32 %v175, %v161
    %v177 = vand.u32 2147483647, %v161
    %vm178 = vcmp.lt.f32.partialorder %v177, 0.0004427343
    %v179 = vsel %vm178, %v176, %v173
    %v180 = vadd.f32 %v152, %v170
    %v181 = vadd.f32 %v153, %v179
    %v182 = vmul.f32 %v146, %v180
    %v183 = vmul.f32 %v147, %v181
    %vm184 = vcmp.lt.s32.totalorder %v140, 2048
    %vm185 = vcmp.lt.s32.totalorder %v141, 2048
    %v186 = vsel %vm184, %v182, 0.0
    %v187 = vsel %vm185, %v183, 0.0
    %v188 = vld [vmem:[#allocation8] sm:$0xff]
    %v189 = vld [vmem:[#allocation8 + $0x8] sm:$0xff]
    %v190 = vld [vmem:[#allocation10] sm:$0xff]
    %v191 = vld [vmem:[#allocation10 + $0x8] sm:$0xff]
    %v192 = vmax.f32 %v188, 0.0
    %v193 = vmax.f32 %v189, 0.0
    %v194 = vmul.f32 %v188, %v190
    %v195 = vmul.f32 %v189, %v191
    %v196 = vsub.f32 %v192, %v194
    %v197 = vsub.f32 %v193, %v195
    %v198 = vand.u32 2147483647, %v188
    %v199 = vand.u32 2147483647, %v189
    %v200 = vsub.f32 0.0, %v198
    %v201 = vsub.f32 0.0, %v199
    %v202 = vmul.f32 %v200, 1.442695
    %v203 = vpow.pop %v202
    %v204 = vmul.f32 %v201, 1.442695
    %v205 = vpow.pop %v204
    %v206 = vadd.f32 %v203, 1.0
    %v207 = vlog2.pop %v206
    %v208 = vmul.f32 %v207, 0.6931472
    %v209 = vmul.f32 -0.5, %v203
    %v210 = vadd.f32 %v209, 1.0
    %v211 = vmul.f32 %v210, %v203
    %v212 = vand.u32 2147483647, %v203
    %vm213 = vcmp.lt.f32.partialorder %v212, 0.0004427343
    %v214 = vsel %vm213, %v211, %v208
    %v215 = vadd.f32 %v205, 1.0
    %v216 = vlog2.pop %v215
    %v217 = vmul.f32 %v216, 0.6931472
    %v218 = vmul.f32 -0.5, %v205
    %v219 = vadd.f32 %v218, 1.0
    %v220 = vmul.f32 %v219, %v205
    %v221 = vand.u32 2147483647, %v205
    %vm222 = vcmp.lt.f32.partialorder %v221, 0.0004427343
    %v223 = vsel %vm222, %v220, %v217
    %v224 = vadd.f32 %v196, %v214
    %v225 = vadd.f32 %v197, %v223
    %v226 = vsel %vm184, %v224, 0.0
    %v227 = vsel %vm185, %v225, 0.0
    %v228 = vld [vmem:[#allocation11] sm:$0xff]
    %v229 = vadd.f32 %v186, %v187
    %v230 = vadd.f32 %v228, %v229
    %231 = vst [vmem:[#allocation11] sm:$0xff] %v230
    %v232 = vld [vmem:[#allocation12] sm:$0xff]
    %v233 = vadd.f32 %v226, %v227
    %v234 = vadd.f32 %v232, %v233
    %235 = vst [vmem:[#allocation12] sm:$0xff] %v234
    // Predicated region
    $region46: #{tpu_custom_call.1} parent=1 // pred_check
      _
    $region47: #{tpu_custom_call.1} parent=1 // pred_check_branch
      %237 = sbr.rel (0) target = $region49
    $region48: #{tpu_custom_call.1} parent=1 // pred_region
      %s239 = ssub.s32 128, 128
      %240 = vsyncadd [#allocation4], %s239
      %s242 = sshll.u32 [#allocation11], 4
      %s243 = int_to_ptr.vmem [resolvable:$true] %s242
      %245 = dma.vmem_to_hbm [thread:$0]  %s243, 128, %s5, [#allocation4]
    $region49: #{tpu_custom_call.1} parent=1 // pred_fallthru
      _
    // Predicated region
    $region50: #{tpu_custom_call.1} parent=1 // pred_check
      _
    $region51: #{tpu_custom_call.1} parent=1 // pred_check_branch
      %247 = sbr.rel (0) target = $region53
    $region52: #{tpu_custom_call.1} parent=1 // pred_region
      %s249 = ssub.s32 128, 128
      %250 = vsyncadd [#allocation13], %s249
      %s252 = sshll.u32 [#allocation12], 4
      %s253 = int_to_ptr.vmem [resolvable:$true] %s252
      %255 = dma.vmem_to_hbm [thread:$0]  %s253, 128, %s6, [#allocation13]
    $region53: #{tpu_custom_call.1} parent=1 // pred_fallthru
      _
    // Predicated region
    $region54: #{tpu_custom_call.1} parent=1 // pred_check
      _
    $region55: #{tpu_custom_call.1} parent=1 // pred_check_branch
      %257 = sbr.rel (0) target = $region57
    $region56: #{tpu_custom_call.1} parent=1 // pred_region
      %258 = dma.done [#allocation4], 128
    $region57: #{tpu_custom_call.1} parent=1 // pred_fallthru
      _
    // Predicated region
    $region58: #{tpu_custom_call.1} parent=1 // pred_check
      _
    $region59: #{tpu_custom_call.1} parent=1 // pred_check_branch
      %260 = sbr.rel (0) target = $region61
    $region60: #{tpu_custom_call.1} parent=1 // pred_region
      %261 = dma.done [#allocation13], 128
    $region61: #{tpu_custom_call.1} parent=1 // pred_fallthru
      _
    %262 = vsyncpa [#allocation3], 1
    %263 = vsyncpa [#allocation6], 1
    %264 = vsyncpa [#allocation9], 1
    %265 = vsyncpa [#allocation4], 1
    %266 = vsyncpa [#allocation13], 1

</llo_original>
